<compile_context>
chip_gen: v7x
topology: tpu7x:2x2x1
jax: 0.10.0
libtpu: 0.0.40
codegen_flags: <defaults>
</compile_context>

<pallas_src>
import functools

import jax
import jax.numpy as jnp
from jax.experimental import pallas as pl
from jax.experimental.pallas import tpu as pltpu

LANES = 128
TM_MAX = 1024   # rows per block: 1024*128*4B = 512 KiB/buffer (f32); safe on all gens
NC_MAX = 2      # parallel chunks (megacore on v7x; harmless single loop elsewhere)


def _gen_loss_kernel(x_ref, o_ref, acc_ref, *, rows, tm, kt, acc_rows, needs_mask):
    c = pl.program_id(0)   # parallel chunk
    k = pl.program_id(1)   # reduction step within the chunk

    @pl.when(k == 0)
    def _():
        acc_ref[...] = jnp.zeros_like(acc_ref)

    x = x_ref[...].astype(jnp.float32)
    # BCE with target = 1:  -log(x), log clamped to -100 like torch.nn.BCELoss.
    nll = -jnp.maximum(jnp.log(x), -100.0)

    if needs_mask:
        # Mask rows past the logical end of the slab (ragged edge block and/or
        # duplicated overflow blocks from the parallel split).  `rows`, `tm`,
        # `kt` are Python ints, so this whole branch vanishes when not needed.
        block_idx = c * kt + k
        row_ids = block_idx * tm + jax.lax.broadcasted_iota(jnp.int32, (tm, 1), 0)
        nll = jnp.where(row_ids < rows, nll, 0.0)

    if acc_rows == 8:
        # (tm, 128) -> (tm//8, 8, 128); summing the leading axis is plain
        # vreg+vreg VALU adds -- no XLU cross-sublane reduce per step.
        acc_ref[...] += jnp.sum(nll.reshape(tm // 8, 8, LANES), axis=0)
    else:
        # Tiny ragged input (rows < 8 or not a multiple of 8, single block):
        # a one-off cross-sublane sum is fine.
        acc_ref[...] += jnp.sum(nll, axis=0, keepdims=True)

    @pl.when(k == kt - 1)
    def _():
        # Dump the raw (acc_rows, 128) partial sums; final reduction + mean +
        # scale happen on this tiny array in the JAX wrapper.
        o_ref[...] = acc_ref[...]


def generator_loss(fake_disc_probs, scale=1.0):
    """Pallas equivalent of GeneratorLoss(scale)(fake_disc_probs)."""
    n = fake_disc_probs.size
    flat = jnp.reshape(fake_disc_probs, (-1,))   # native dtype; cast in-kernel

    # Lane tail: only if numel is not a multiple of 128 do we pad (with 1.0,
    # which contributes -log(1) = 0).  Common case: free reshape, no HBM copy.
    if n % LANES != 0:
        pad = LANES - (n % LANES)
        flat = jnp.concatenate([flat, jnp.ones((pad,), dtype=flat.dtype)], axis=0)
    rows = flat.shape[0] // LANES
    x2d = jnp.reshape(flat, (rows, LANES))

    # Row tile: as big as possible (full-dim block for small inputs, which is
    # always a legal block shape; otherwise a multiple-of-8 1024-row tile).
    tm = rows if rows <= TM_MAX else TM_MAX
    acc_rows = 8 if tm % 8 == 0 else 1

    total_blocks = -(-rows // tm)
    nc = min(NC_MAX, total_blocks)      # parallel chunks (v7x megacore)
    kt = -(-total_blocks // nc)         # reduction steps per chunk

    needs_mask = (total_blocks * tm != rows) or (nc * kt != total_blocks)
    if nc * kt == total_blocks:
        x_index_map = lambda c, k: (c * kt + k, 0)
    else:
        last_block = total_blocks - 1
        # Overflow (c, k) pairs re-read the last valid block; their rows are
        # fully masked in-kernel so they contribute exactly 0.
        x_index_map = lambda c, k: (jnp.minimum(c * kt + k, last_block), 0)

    kernel = functools.partial(
        _gen_loss_kernel,
        rows=rows, tm=tm, kt=kt, acc_rows=acc_rows, needs_mask=needs_mask,
    )

    partials = pl.pallas_call(
        kernel,
        out_shape=jax.ShapeDtypeStruct((nc * acc_rows, LANES), jnp.float32),
        grid_spec=pltpu.PrefetchScalarGridSpec(
            num_scalar_prefetch=0,
            grid=(nc, kt),
            in_specs=[pl.BlockSpec((tm, LANES), x_index_map)],
            out_specs=pl.BlockSpec((acc_rows, LANES), lambda c, k: (c, 0)),
            scratch_shapes=[pltpu.VMEM((acc_rows, LANES), jnp.float32)],
        ),
        compiler_params=pltpu.CompilerParams(
            dimension_semantics=("parallel", "arbitrary"),
        ),
    )(x2d)

    # Final tiny reduction (nc*8 x 128 floats) + mean over the ORIGINAL n + scale.
    return jnp.sum(partials) * (float(scale) / float(n))


if __name__ == "__main__":
    key = jax.random.PRNGKey(0)
    # fake_disc_probs: discriminator probabilities in (0, 1), NCHW
    x = jax.random.uniform(
        key, (2, 4, 16, 16), dtype=jnp.float32, minval=1e-4, maxval=1.0 - 1e-4
    )
    scale = 1.0

    loss = generator_loss(x, scale=scale)
    loss = jax.block_until_ready(loss)

    # Reference in plain JAX (mirrors torch.nn.BCELoss with target=1, mean reduction).
    ref = jnp.mean(-jnp.maximum(jnp.log(x), -100.0)) * scale
    assert jnp.allclose(loss, ref, rtol=1e-5, atol=1e-5), (loss, ref)

    print("KERNEL_OK")
</pallas_src>

<mosaic_0001>
module attributes {stable_mosaic.version = 11 : i64} {
  func.func @_gen_loss_kernel(%arg0: i32, %arg1: i32, %arg2: memref<16x128xf32, #tpu.memory_space<vmem>>, %arg3: memref<8x128xf32, #tpu.memory_space<vmem>>, %arg4: memref<8x128xf32, #tpu.memory_space<vmem>>) attributes {dimension_semantics = [#tpu.dimension_semantics<parallel>, #tpu.dimension_semantics<arbitrary>], iteration_bounds = array<i64: 1, 1>, scalar_prefetch = 0 : i64, scratch_operands = 1 : i64, tpu.core_type = #tpu.core_type<tc>, window_params = [{transform_indices = @transform_0, window_bounds = array<i64: 16, 128>}, {transform_indices = @transform_1, window_bounds = array<i64: 8, 128>}]} {
    %c0_i32 = arith.constant 0 : i32
    %0 = arith.cmpi eq, %arg1, %c0_i32 : i32
    %1 = arith.extui %0 : i1 to i32
    %c0_i32_0 = arith.constant 0 : i32
    %2 = arith.cmpi ne, %1, %c0_i32_0 : i32
    scf.if %2 {
      %cst_10 = arith.constant 0.000000e+00 : f32
      %17 = vector.broadcast %cst_10 : f32 to vector<8x128xf32>
      %c0_11 = arith.constant 0 : index
      %c0_12 = arith.constant 0 : index
      %18 = vector.load %arg4[%c0_11, %c0_12] : memref<8x128xf32, #tpu.memory_space<vmem>>, vector<8x128xf32>
      tpu.vector_store %arg4[%c0_11, %c0_12], %17 {strides = array<i32>} : memref<8x128xf32, #tpu.memory_space<vmem>>, vector<8x128xf32>,
    } else {
    }
    %c0 = arith.constant 0 : index
    %c0_1 = arith.constant 0 : index
    %3 = vector.load %arg2[%c0, %c0_1] : memref<16x128xf32, #tpu.memory_space<vmem>>, vector<16x128xf32>
    %4 = math.log %3 : vector<16x128xf32>
    %cst = arith.constant -1.000000e+02 : f32
    %5 = vector.broadcast %cst : f32 to vector<16x128xf32>
    %6 = arith.maximumf %4, %5 : vector<16x128xf32>
    %cst_2 = arith.constant 0.000000e+00 : f32
    %7 = vector.broadcast %cst_2 : f32 to vector<16x128xf32>
    %8 = arith.subf %7, %6 : vector<16x128xf32>
    %c0_3 = arith.constant 0 : index
    %c0_4 = arith.constant 0 : index
    %9 = vector.load %arg4[%c0_3, %c0_4] : memref<8x128xf32, #tpu.memory_space<vmem>>, vector<8x128xf32>
    %10 = vector.shape_cast %8 : vector<16x128xf32> to vector<2x8x128xf32>
    %cst_5 = arith.constant dense<0.000000e+00> : vector<8x128xf32>
    %11 = vector.multi_reduction <add>, %10, %cst_5 [0] : vector<2x8x128xf32> to vector<8x128xf32>
    %12 = arith.addf %9, %11 : vector<8x128xf32>
    %c0_6 = arith.constant 0 : index
    %c0_7 = arith.constant 0 : index
    %13 = vector.load %arg4[%c0_6, %c0_7] : memref<8x128xf32, #tpu.memory_space<vmem>>, vector<8x128xf32>
    tpu.vector_store %arg4[%c0_6, %c0_7], %12 {strides = array<i32>} : memref<8x128xf32, #tpu.memory_space<vmem>>, vector<8x128xf32>,
    %c0_i32_8 = arith.constant 0 : i32
    %14 = arith.cmpi eq, %arg1, %c0_i32_8 : i32
    %15 = arith.extui %14 : i1 to i32
    %c0_i32_9 = arith.constant 0 : i32
    %16 = arith.cmpi ne, %15, %c0_i32_9 : i32
    scf.if %16 {
      %c0_10 = arith.constant 0 : index
      %c0_11 = arith.constant 0 : index
      %17 = vector.load %arg4[%c0_10, %c0_11] : memref<8x128xf32, #tpu.memory_space<vmem>>, vector<8x128xf32>
      %c0_12 = arith.constant 0 : index
      %c0_13 = arith.constant 0 : index
      %18 = vector.load %arg3[%c0_12, %c0_13] : memref<8x128xf32, #tpu.memory_space<vmem>>, vector<8x128xf32>
      tpu.vector_store %arg3[%c0_12, %c0_13], %17 {strides = array<i32>} : memref<8x128xf32, #tpu.memory_space<vmem>>, vector<8x128xf32>,
    } else {
    }
    return
  }
  func.func @transform_0(%arg0: i32, %arg1: i32) -> (i32, i32) {
    %c1_i32 = arith.constant 1 : i32
    %0 = arith.muli %arg0, %c1_i32 : i32
    %1 = arith.addi %0, %arg1 : i32
    %c0_i32 = arith.constant 0 : i32
    %c0_i32_0 = arith.constant 0 : i32
    return %1, %c0_i32 : i32, i32
  }
  func.func @transform_1(%arg0: i32, %arg1: i32) -> (i32, i32) {
    %c0_i32 = arith.constant 0 : i32
    %c0_i32_0 = arith.constant 0 : i32
    return %arg0, %c0_i32 : i32, i32
  }
}

</mosaic_0001>

<llo_original>
// kernel: tpu_custom_call.1
$region0: #{tpu_custom_call.1}
  #allocation0 [shape = 'u32[]', space=smem, size = 0x4, offset = 0x4, fixed_abs, tag = 'smem constant byte address 0x4 - core index']
  #allocation1 [shape = 'u32[144,128]{1,0:T(1,128)}', space=vmem, size = 0x12000, scoped, tag = 'internal scratch']
  #allocation2 [shape = 'f32[8,128]{1,0:T(8,128)}', space=vmem, size = 0x1000, scoped, tag = 'scratch operand']
  %s0 = inlined_call_operand.hbm [shape: f32[16,128], index: 0, kind: input, shape index: {}]
  %s1 = inlined_call_operand.hbm [shape: f32[8,128], index: 1, kind: output, shape index: {}]
  %s2 = sld [smem:[#allocation0]]
  $region26: #{tpu_custom_call.1} parent=0
    _
  %s4 = ssub.s32 1, %s2
  %s5 = scalar_select 0, %s4, %s2
  $region1: #{tpu_custom_call.1} parent=0
    #allocation3 [shape = 'u8[8192]{0}', space=vmem, size = 0x2000, scoped, tag = 'input window, operand 0, single buffered']
    #allocation4 [shape = 's32[1]{0}', space=sflag, size = 0x4, scoped, tag = 'scoped memory for tpu_custom_call.1']
    #allocation5 [shape = 's32[1]{0}', space=sflag, size = 0x4, scoped, tag = 'scoped memory for tpu_custom_call.1']
    #allocation6 [shape = 'u8[4096]{0}', space=vmem, size = 0x1000, scoped, tag = 'output window, operand 0, single buffered']
    %6 = vsyncpa [#allocation4], 0
    %7 = vsyncpa [#allocation5], 0
    // Predicated region
    $region2: #{tpu_custom_call.1} parent=1 // pred_check
      _
    $region3: #{tpu_custom_call.1} parent=1 // pred_check_branch
      %9 = sbr.rel (0) target = $region5
    $region4: #{tpu_custom_call.1} parent=1 // pred_region
      %s10 = sadd.s32 0, 0
      %s11 = smul.u32 2, %s10
      %s13 = ssub.s32 256, 256
      %14 = vsyncadd [#allocation4], %s13
      %s15 = smul.addr %s11, 128
      %s16 = scalar_lea.hbm %s0, %s15
      %s17 = sshll.u32 [#allocation3], 4
      %s18 = int_to_ptr.vmem [resolvable:$true] %s17
      %23 = dma.hbm_to_vmem [thread:$0]  %s16, 256, %s18, [#allocation4], 128, 128, 8
    $region5: #{tpu_custom_call.1} parent=1 // pred_fallthru
      _
    // Predicated region
    $region6: #{tpu_custom_call.1} parent=1 // pred_check
      _
    $region7: #{tpu_custom_call.1} parent=1 // pred_check_branch
      %25 = sbr.rel (0) target = $region9
    $region8: #{tpu_custom_call.1} parent=1 // pred_region
      %26 = dma.done [#allocation4], 256
    $region9: #{tpu_custom_call.1} parent=1 // pred_fallthru
      _
    %s27 = sadd.s32 0, 0
    %s28 = smul.u32 2, %s27
    %p29 = scmp.eq.s32.totalorder 0, 0
    // Predicated region
    $region10: #{tpu_custom_call.1} parent=1 // pred_check
      %p30 = pneg %p29
    $region11: #{tpu_custom_call.1} parent=1 // pred_check_branch
      %32 = sbr.rel (%p30) target = $region13
    $region12: #{tpu_custom_call.1} parent=1 // pred_region
      %33 = vst [vmem:[#allocation2] sm:$0xff] 0.0
    $region13: #{tpu_custom_call.1} parent=1 // pred_fallthru
      _
    %v34 = vld [vmem:[#allocation3] sm:$0xff]
    %v35 = vld [vmem:[#allocation3 + $0x8] sm:$0xff]
    %v36 = vlog2.pop %v34
    %v37 = vmul.f32 %v36, 0.6931472
    %v38 = vlog2.pop %v35
    %v39 = vmul.f32 %v38, 0.6931472
    %v40 = vmax.f32 %v37, -100.0
    %v41 = vmax.f32 %v39, -100.0
    %v42 = vsub.f32 0.0, %v40
    %v43 = vsub.f32 0.0, %v41
    %v44 = vld [vmem:[#allocation2] sm:$0xff]
    %v45 = vadd.f32 %v42, %v43
    %v46 = vadd.f32 %v44, %v45
    %47 = vst [vmem:[#allocation2] sm:$0xff] %v46
    // Predicated region
    $region14: #{tpu_custom_call.1} parent=1 // pred_check
      %p48 = pneg %p29
    $region15: #{tpu_custom_call.1} parent=1 // pred_check_branch
      %50 = sbr.rel (%p48) target = $region17
    $region16: #{tpu_custom_call.1} parent=1 // pred_region
      %v51 = vld [vmem:[#allocation2] sm:$0xff]
      %52 = vst [vmem:[#allocation6] sm:$0xff] %v51
    $region17: #{tpu_custom_call.1} parent=1 // pred_fallthru
      _
    // Predicated region
    $region18: #{tpu_custom_call.1} parent=1 // pred_check
      _
    $region19: #{tpu_custom_call.1} parent=1 // pred_check_branch
      %54 = sbr.rel (0) target = $region21
    $region20: #{tpu_custom_call.1} parent=1 // pred_region
      %s56 = ssub.s32 128, 128
      %57 = vsyncadd [#allocation5], %s56
      %s59 = sshll.u32 [#allocation6], 4
      %s60 = int_to_ptr.vmem [resolvable:$true] %s59
      %62 = dma.vmem_to_hbm [thread:$0]  %s60, 128, %s1, [#allocation5]
    $region21: #{tpu_custom_call.1} parent=1 // pred_fallthru
      _
    // Predicated region
    $region22: #{tpu_custom_call.1} parent=1 // pred_check
      _
    $region23: #{tpu_custom_call.1} parent=1 // pred_check_branch
      %64 = sbr.rel (0) target = $region25
    $region24: #{tpu_custom_call.1} parent=1 // pred_region
      %65 = dma.done [#allocation5], 128
    $region25: #{tpu_custom_call.1} parent=1 // pred_fallthru
      _
    %66 = vsyncpa [#allocation4], 1
    %67 = vsyncpa [#allocation5], 1

</llo_original>
